<compile_context>
chip_gen: v7x
topology: tpu7x:2x2x1
jax: 0.10.0
libtpu: 0.0.40
codegen_flags: <defaults>
</compile_context>

<pallas_src>
import jax
import jax.numpy as jnp
from jax import lax
from jax.experimental import pallas as pl
from jax.experimental.pallas import tpu as pltpu


def _fc_sum_kernel(x1_ref, x2_ref, w_ref, b2_ref, o_ref):
    # x1_ref, x2_ref: (TB, K) ; w_ref: (N, K) ; b2_ref: (N, 1) ; o_ref: (N, TB)
    s = x1_ref[...] + x2_ref[...]                       # VPU add -> single dot
    # Lane-dense (N, TB) result: contract K of W with K of s (no transpose of s).
    y = lax.dot_general(
        w_ref[...], s,
        dimension_numbers=(((1,), (1,)), ((), ())),
        preferred_element_type=jnp.float32,
    )
    o_ref[...] = (y + b2_ref[...]).astype(o_ref.dtype)  # broadcast (N,1) bias


def my_model_forward(inp1, inp2, weight, bias, *, tb=8192):
    """weight: (2, 128) as in torch Linear; bias: (2,). Returns (B, 2)."""
    B, K = inp1.shape
    N = weight.shape[0]

    # Batch tile: 8192 rows (f32) -> 16 MiB double-buffered input working set,
    # well inside every generation's physical VMEM once the scoped limit is
    # raised to 32 MiB below.  If B < tb, a single full-extent block is used.
    tb = min(tb, B)

    w = weight.astype(jnp.float32)                         # (N, K), used as-is
    b2 = (2.0 * bias).reshape(N, 1).astype(jnp.float32)    # fold bias doubling

    itemsize = jnp.dtype(inp1.dtype).itemsize
    cost = pl.CostEstimate(
        flops=2 * B * K * N + B * K,
        transcendentals=0,
        bytes_accessed=2 * B * K * itemsize + B * N * itemsize + N * K * 4,
    )

    grid = (pl.cdiv(B, tb),)

    out_nb = pl.pallas_call(
        _fc_sum_kernel,
        out_shape=jax.ShapeDtypeStruct((N, B), inp1.dtype),
        grid_spec=pl.GridSpec(
            grid=grid,
            in_specs=[
                pl.BlockSpec((tb, K), lambda i: (i, 0)),   # inp1 tile, pipelined
                pl.BlockSpec((tb, K), lambda i: (i, 0)),   # inp2 tile, pipelined
                pl.BlockSpec((N, K), lambda i: (0, 0)),    # weight: VMEM-resident
                pl.BlockSpec((N, 1), lambda i: (0, 0)),    # 2*bias: VMEM-resident
            ],
            out_specs=pl.BlockSpec((N, tb), lambda i: (0, i)),  # lane-dense output
        ),
        compiler_params=pltpu.CompilerParams(
            dimension_semantics=("parallel",),   # batch tiles independent (v7x TCs)
            vmem_limit_bytes=32 * 1024 * 1024,   # cover tb=8192 on v5e's 16 MiB default
        ),
        cost_estimate=cost,
    )(inp1, inp2, w, b2)

    # Tiny (2, B) -> (B, 2) transpose in the wrapper (negligible cost).
    return out_nb.T


if __name__ == "__main__":
    key = jax.random.PRNGKey(0)
    k1, k2, kw, kb = jax.random.split(key, 4)

    B, K, N = 8, 128, 2
    inp1 = jax.random.normal(k1, (B, K), dtype=jnp.float32)
    inp2 = jax.random.normal(k2, (B, K), dtype=jnp.float32)

    # Deterministic Linear(128, 2) params (mimic torch's uniform(-1/sqrt(K), 1/sqrt(K)))
    bound = 1.0 / (K ** 0.5)
    weight = jax.random.uniform(kw, (N, K), minval=-bound, maxval=bound, dtype=jnp.float32)
    bias = jax.random.uniform(kb, (N,), minval=-bound, maxval=bound, dtype=jnp.float32)

    out = my_model_forward(inp1, inp2, weight, bias)
    out = jax.block_until_ready(out)

    # Reference check (plain JAX)
    ref = (inp1 @ weight.T + bias) + (inp2 @ weight.T + bias)
    assert out.shape == (B, N)
    assert jnp.allclose(out, ref, atol=1e-5, rtol=1e-5)

    print("KERNEL_OK")
</pallas_src>

<mosaic_0001>
module attributes {stable_mosaic.version = 11 : i64} {
  func.func @_fc_sum_kernel(%arg0: i32, %arg1: memref<8x128xf32, #tpu.memory_space<vmem>>, %arg2: memref<8x128xf32, #tpu.memory_space<vmem>>, %arg3: memref<2x128xf32, #tpu.memory_space<vmem>>, %arg4: memref<2x1xf32, #tpu.memory_space<vmem>>, %arg5: memref<2x8xf32, #tpu.memory_space<vmem>>) attributes {dimension_semantics = [#tpu.dimension_semantics<parallel>], iteration_bounds = array<i64: 1>, scalar_prefetch = 0 : i64, scratch_operands = 0 : i64, tpu.core_type = #tpu.core_type<tc>, window_params = [{transform_indices = @transform_0, window_bounds = array<i64: 8, 128>}, {transform_indices = @transform_1, window_bounds = array<i64: 8, 128>}, {pipeline_mode = #tpu.pipeline_mode<synchronous>, transform_indices = @transform_2, window_bounds = array<i64: 2, 128>}, {pipeline_mode = #tpu.pipeline_mode<synchronous>, transform_indices = @transform_3, window_bounds = array<i64: 2, 1>}, {transform_indices = @transform_4, window_bounds = array<i64: 2, 8>}]} {
    %c0 = arith.constant 0 : index
    %c0_0 = arith.constant 0 : index
    %0 = vector.load %arg1[%c0, %c0_0] : memref<8x128xf32, #tpu.memory_space<vmem>>, vector<8x128xf32>
    %c0_1 = arith.constant 0 : index
    %c0_2 = arith.constant 0 : index
    %1 = vector.load %arg2[%c0_1, %c0_2] : memref<8x128xf32, #tpu.memory_space<vmem>>, vector<8x128xf32>
    %2 = arith.addf %0, %1 : vector<8x128xf32>
    %c0_3 = arith.constant 0 : index
    %c0_4 = arith.constant 0 : index
    %3 = vector.load %arg3[%c0_3, %c0_4] : memref<2x128xf32, #tpu.memory_space<vmem>>, vector<2x128xf32>
    %cst = arith.constant dense<0.000000e+00> : vector<2x8xf32>
    %4 = tpu.matmul %3, %2, %cst {dimension_numbers = #tpu.dot_dimension_numbers<[1], [1], [0], [0], [0, 0, 1, 0], [], []>} : vector<2x128xf32>, vector<8x128xf32>, vector<2x8xf32> -> vector<2x8xf32>
    %c0_5 = arith.constant 0 : index
    %c0_6 = arith.constant 0 : index
    %5 = vector.load %arg4[%c0_5, %c0_6] : memref<2x1xf32, #tpu.memory_space<vmem>>, vector<2x1xf32>
    %6 = vector.broadcast %5 : vector<2x1xf32> to vector<2x8xf32>
    %7 = arith.addf %4, %6 : vector<2x8xf32>
    %c0_7 = arith.constant 0 : index
    %c0_8 = arith.constant 0 : index
    %8 = vector.load %arg5[%c0_7, %c0_8] : memref<2x8xf32, #tpu.memory_space<vmem>>, vector<2x8xf32>
    tpu.vector_store %arg5[%c0_7, %c0_8], %7 {strides = array<i32>} : memref<2x8xf32, #tpu.memory_space<vmem>>, vector<2x8xf32>,
    return
  }
  func.func @transform_0(%arg0: i32) -> (i32, i32) {
    %c0_i32 = arith.constant 0 : i32
    %c0_i32_0 = arith.constant 0 : i32
    return %arg0, %c0_i32 : i32, i32
  }
  func.func @transform_1(%arg0: i32) -> (i32, i32) {
    %c0_i32 = arith.constant 0 : i32
    %c0_i32_0 = arith.constant 0 : i32
    return %arg0, %c0_i32 : i32, i32
  }
  func.func @transform_2(%arg0: i32) -> (i32, i32) {
    %c0_i32 = arith.constant 0 : i32
    %c0_i32_0 = arith.constant 0 : i32
    %c0_i32_1 = arith.constant 0 : i32
    return %c0_i32, %c0_i32_0 : i32, i32
  }
  func.func @transform_3(%arg0: i32) -> (i32, i32) {
    %c0_i32 = arith.constant 0 : i32
    %c0_i32_0 = arith.constant 0 : i32
    %c0_i32_1 = arith.constant 0 : i32
    return %c0_i32, %c0_i32_0 : i32, i32
  }
  func.func @transform_4(%arg0: i32) -> (i32, i32) {
    %c0_i32 = arith.constant 0 : i32
    %c0_i32_0 = arith.constant 0 : i32
    return %c0_i32, %arg0 : i32, i32
  }
}

</mosaic_0001>

<llo_original>
// kernel: tpu_custom_call.1
$region0: #{tpu_custom_call.1}
  #allocation0 [shape = 'u32[]', space=smem, size = 0x4, offset = 0x4, fixed_abs, tag = 'smem constant byte address 0x4 - core index']
  #allocation1 [shape = 'u32[144,128]{1,0:T(1,128)}', space=vmem, size = 0x12000, scoped, tag = 'internal scratch']
  %s0 = inlined_call_operand.hbm [shape: f32[8,128], index: 0, kind: input, shape index: {}]
  %s1 = inlined_call_operand.hbm [shape: f32[8,128], index: 1, kind: input, shape index: {}]
  %s2 = inlined_call_operand.vmem [shape: f32[2,128], index: 2, kind: input, shape index: {}]
  %s3 = inlined_call_operand.vmem [shape: f32[2,1], index: 3, kind: input, shape index: {}]
  %s4 = inlined_call_operand.hbm [shape: f32[2,8], index: 4, kind: output, shape index: {}]
  %s5 = sld [smem:[#allocation0]]
  $region34: #{tpu_custom_call.1} parent=0
    _
  %s7 = ssub.s32 1, %s5
  %s8 = scalar_select 0, %s7, %s5
  $region1: #{tpu_custom_call.1} parent=0
    #allocation2 [shape = 'u8[4096]{0}', space=vmem, size = 0x1000, scoped, tag = 'input window, operand 0, single buffered']
    #allocation3 [shape = 's32[1]{0}', space=sflag, size = 0x4, scoped, tag = 'scoped memory for tpu_custom_call.1']
    #allocation4 [shape = 's32[1]{0}', space=sflag, size = 0x4, scoped, tag = 'scoped memory for tpu_custom_call.1']
    #allocation5 [shape = 'u8[4096]{0}', space=vmem, size = 0x1000, scoped, tag = 'input window, operand 1, single buffered']
    #allocation6 [shape = 's32[1]{0}', space=sflag, size = 0x4, scoped, tag = 'scoped memory for tpu_custom_call.1']
    #allocation7 [shape = 'u8[1024]{0}', space=vmem, size = 0x400, scoped, tag = 'output window, operand 0, single buffered']
    %9 = vsyncpa [#allocation3], 0
    %10 = vsyncpa [#allocation6], 0
    %11 = vsyncpa [#allocation4], 0
    // Predicated region
    $region2: #{tpu_custom_call.1} parent=1 // pred_check
      _
    $region3: #{tpu_custom_call.1} parent=1 // pred_check_branch
      %13 = sbr.rel (0) target = $region5
    $region4: #{tpu_custom_call.1} parent=1 // pred_region
      %s15 = ssub.s32 128, 128
      %16 = vsyncadd [#allocation3], %s15
      %s18 = sshll.u32 [#allocation2], 4
      %s19 = int_to_ptr.vmem [resolvable:$true] %s18
      %21 = dma.hbm_to_vmem [thread:$0]  %s0, 128, %s19, [#allocation3]
    $region5: #{tpu_custom_call.1} parent=1 // pred_fallthru
      _
    // Predicated region
    $region6: #{tpu_custom_call.1} parent=1 // pred_check
      _
    $region7: #{tpu_custom_call.1} parent=1 // pred_check_branch
      %23 = sbr.rel (0) target = $region9
    $region8: #{tpu_custom_call.1} parent=1 // pred_region
      %s25 = ssub.s32 128, 128
      %26 = vsyncadd [#allocation6], %s25
      %s28 = sshll.u32 [#allocation5], 4
      %s29 = int_to_ptr.vmem [resolvable:$true] %s28
      %31 = dma.hbm_to_vmem [thread:$0]  %s1, 128, %s29, [#allocation6]
    $region9: #{tpu_custom_call.1} parent=1 // pred_fallthru
      _
    // Predicated region
    $region10: #{tpu_custom_call.1} parent=1 // pred_check
      _
    $region11: #{tpu_custom_call.1} parent=1 // pred_check_branch
      %33 = sbr.rel (0) target = $region13
    $region12: #{tpu_custom_call.1} parent=1 // pred_region
      _
    $region13: #{tpu_custom_call.1} parent=1 // pred_fallthru
      _
    // Predicated region
    $region14: #{tpu_custom_call.1} parent=1 // pred_check
      _
    $region15: #{tpu_custom_call.1} parent=1 // pred_check_branch
      %35 = sbr.rel (0) target = $region17
    $region16: #{tpu_custom_call.1} parent=1 // pred_region
      _
    $region17: #{tpu_custom_call.1} parent=1 // pred_fallthru
      _
    // Predicated region
    $region18: #{tpu_custom_call.1} parent=1 // pred_check
      _
    $region19: #{tpu_custom_call.1} parent=1 // pred_check_branch
      %37 = sbr.rel (0) target = $region21
    $region20: #{tpu_custom_call.1} parent=1 // pred_region
      %38 = dma.done [#allocation3], 128
    $region21: #{tpu_custom_call.1} parent=1 // pred_fallthru
      _
    // Predicated region
    $region22: #{tpu_custom_call.1} parent=1 // pred_check
      _
    $region23: #{tpu_custom_call.1} parent=1 // pred_check_branch
      %40 = sbr.rel (0) target = $region25
    $region24: #{tpu_custom_call.1} parent=1 // pred_region
      %41 = dma.done [#allocation6], 128
    $region25: #{tpu_custom_call.1} parent=1 // pred_fallthru
      _
    %v42 = vld [vmem:[#allocation2] sm:$0xff]
    %v43 = vld [vmem:[#allocation5] sm:$0xff]
    %v44 = vadd.f32 %v42, %v43
    %v45 = vld [vmem:[%s2] sm:$0x3]
    %v46 = vld [vmem:[%s3] sm:$0x3]
    %48 = vset.pattern.permute.xlu0 0
    %49 = vperm.xlu0 %48, %v46
    %v50 = vpop.permute.xlu0 %49
    %52 = vmatprep.subr.mxu0 0.0
    %53 = vmatpush1.xpose.msra.mxu0 %v44
    %54 = vmatprep.subr.mxu0 0.0
    %55 = vmatpush1.xpose.msra.mxu0 0.0
    %56 = vmatprep.subr.mxu0 0.0
    %57 = vmatpush1.xpose.msra.mxu0 0.0
    %58 = vmatprep.subr.mxu0 0.0
    %59 = vmatpush1.xpose.msra.mxu0 0.0
    %60 = vmatprep.subr.mxu0 0.0
    %61 = vmatpush1.xpose.msra.mxu0 0.0
    %62 = vmatprep.subr.mxu0 0.0
    %63 = vmatpush1.xpose.msra.mxu0 0.0
    %64 = vmatprep.subr.mxu0 0.0
    %65 = vmatpush1.xpose.msra.mxu0 0.0
    %66 = vmatprep.subr.mxu0 0.0
    %67 = vmatpush1.xpose.msra.mxu0 0.0
    %68 = vmatprep.subr.mxu0 0.0
    %69 = vmatpush1.xpose.msra.mxu0 0.0
    %70 = vmatprep.subr.mxu0 0.0
    %71 = vmatpush1.xpose.msra.mxu0 0.0
    %72 = vmatprep.subr.mxu0 0.0
    %73 = vmatpush1.xpose.msra.mxu0 0.0
    %74 = vmatprep.subr.mxu0 0.0
    %75 = vmatpush1.xpose.msra.mxu0 0.0
    %76 = vmatprep.subr.mxu0 0.0
    %77 = vmatpush1.xpose.msra.mxu0 0.0
    %78 = vmatprep.subr.mxu0 0.0
    %79 = vmatpush1.xpose.msra.mxu0 0.0
    %80 = vmatprep.subr.mxu0 0.0
    %81 = vmatpush1.xpose.msra.mxu0 0.0
    %82 = vmatprep.subr.mxu0 0.0
    %83 = vmatpush1.xpose.msra.mxu0 0.0
    %84 = vmatprep.subr.mxu0 0.0
    %85 = vmatpush1.xpose.msra.mxu0 0.0
    %86 = vmatprep.subr.mxu0 0.0
    %87 = vmatpush1.xpose.msra.mxu0 0.0
    %88 = vmatprep.subr.mxu0 0.0
    %89 = vmatpush1.xpose.msra.mxu0 0.0
    %90 = vmatprep.subr.mxu0 0.0
    %91 = vmatpush1.xpose.msra.mxu0 0.0
    %92 = vmatprep.subr.mxu0 0.0
    %93 = vmatpush1.xpose.msra.mxu0 0.0
    %94 = vmatprep.subr.mxu0 0.0
    %95 = vmatpush1.xpose.msra.mxu0 0.0
    %96 = vmatprep.subr.mxu0 0.0
    %97 = vmatpush1.xpose.msra.mxu0 0.0
    %98 = vmatprep.subr.mxu0 0.0
    %99 = vmatpush1.xpose.msra.mxu0 0.0
    %100 = vmatprep.subr.mxu0 0.0
    %101 = vmatpush1.xpose.msra.mxu0 0.0
    %102 = vmatprep.subr.mxu0 0.0
    %103 = vmatpush1.xpose.msra.mxu0 0.0
    %104 = vmatprep.subr.mxu0 0.0
    %105 = vmatpush1.xpose.msra.mxu0 0.0
    %106 = vmatprep.subr.mxu0 0.0
    %107 = vmatpush1.xpose.msra.mxu0 0.0
    %108 = vmatprep.subr.mxu0 0.0
    %109 = vmatpush1.xpose.msra.mxu0 0.0
    %110 = vmatprep.subr.mxu0 0.0
    %111 = vmatpush1.xpose.msra.mxu0 0.0
    %112 = vmatprep.subr.mxu0 0.0
    %113 = vmatpush1.xpose.msra.mxu0 0.0
    %114 = vmatprep.subr.mxu0 0.0
    %115 = vmatpush1.xpose.msra.mxu0 0.0
    %116 = vmatprep.mubr.f32.mxu0 0.0
    %117 = vmatmul.mubr.f32.gmra.mrb[0].mxu0 %v45
    %v118 = vpop.f32.mrb[0].mxu0
    %v119 = vadd.f32 %v50, %v118
    %v120 = vpop.f32.mrb[0].mxu0
    %121 = vdwg.mxu0
    %vm122 = vcmask 58368
    %123 = vst.msk [vmem:[#allocation7] sm:$0x3] %vm122, %v119
    // Predicated region
    $region26: #{tpu_custom_call.1} parent=1 // pred_check
      _
    $region27: #{tpu_custom_call.1} parent=1 // pred_check_branch
      %125 = sbr.rel (0) target = $region29
    $region28: #{tpu_custom_call.1} parent=1 // pred_region
      %s127 = ssub.s32 32, 32
      %128 = vsyncadd [#allocation4], %s127
      %s130 = sshll.u32 [#allocation7], 4
      %s131 = int_to_ptr.vmem [resolvable:$true] %s130
      %133 = dma.vmem_to_hbm [thread:$0]  %s131, 32, %s4, [#allocation4]
    $region29: #{tpu_custom_call.1} parent=1 // pred_fallthru
      _
    // Predicated region
    $region30: #{tpu_custom_call.1} parent=1 // pred_check
      _
    $region31: #{tpu_custom_call.1} parent=1 // pred_check_branch
      %135 = sbr.rel (0) target = $region33
    $region32: #{tpu_custom_call.1} parent=1 // pred_region
      %136 = dma.done [#allocation4], 32
    $region33: #{tpu_custom_call.1} parent=1 // pred_fallthru
      _
    %137 = vsyncpa [#allocation3], 1
    %138 = vsyncpa [#allocation6], 1
    %139 = vsyncpa [#allocation4], 1

</llo_original>
